<compile_context>
chip_gen: v7x
topology: tpu7x:2x2x1
jax: 0.10.0
libtpu: 0.0.40
codegen_flags: <defaults>
</compile_context>

<pallas_src>
import jax
import jax.numpy as jnp
from jax.experimental import pallas as pl
from jax.experimental.pallas import tpu as pltpu


def bridge_kernel(x_ref, w_ref, o_ref):
    """Fused channel-softmax + match_channels for one (b_blk, C, Lt) tile.

    x_ref : (b_blk, C, Lt)  input tile  (batch x channels x tokens)
    w_ref : (E, C)          match_channels weight (embed_dim x middle_dim)
    o_ref : (b_blk, E, Lt)  output tile
    """
    w = w_ref[...].astype(jnp.float32)              # (E, C), hoisted out of the loop

    # Per-batch loop bounds the live f32 temps to ~3*C*Lt regardless of b_blk.
    @pl.loop(0, x_ref.shape[0])
    def _(i):
        x = x_ref[i].astype(jnp.float32)            # (C, Lt) — f32 softmax (v5e-safe)
        m = jnp.max(x, axis=0, keepdims=True)       # (1, Lt)
        e = jnp.exp(x - m)                          # (C, Lt) unnormalized softmax
        s = jnp.sum(e, axis=0, keepdims=True)       # (1, Lt)
        # Normalization commutes with the linear map -> apply it AFTER the matmul.
        y = jnp.dot(w, e, preferred_element_type=jnp.float32)   # (E, Lt) on the MXU
        y = y * pl.reciprocal(s, approx=False)      # exact recip; E*Lt scale ops only
        o_ref[i] = y.astype(o_ref.dtype)            # lane-dense (E, Lt) store


def _cdiv(a, b):
    return (a + b - 1) // b


def _num_tensorcores():
    """Best-effort TensorCore count per chip (v7x / megacore = 2, v5e/v6e = 1)."""
    try:
        kind = jax.devices()[0].device_kind.lower()
    except Exception:
        return 1
    return 2 if any(t in kind for t in ("v7", "v4", "v5p")) else 1


def w_swintransformer_bridge(enc, w, *, l_tile=None, b_blk=None):
    """enc: (B, C, L), w: (E, C) -> (B, E, L).  Arbitrary B / L supported."""
    B, C, L = enc.shape
    E, C2 = w.shape
    assert C == C2, "weight / channel mismatch"

    dtype_bytes = jnp.dtype(enc.dtype).itemsize
    one_mib = 1 << 20
    l_pad128 = _cdiv(L, 128) * 128
    num_tc = _num_tensorcores()

    # Live VMEM per step: double-buffered input/output blocks + resident weight
    # + per-batch f32 softmax temps (bounded by the in-kernel loop).
    def vmem_bytes(bb, lt):
        return (2 * bb * C * lt * dtype_bytes        # input block, double-buffered
                + 2 * bb * E * lt * dtype_bytes      # output block, double-buffered
                + 2 * E * C * dtype_bytes            # weight (tiny)
                + 4 * 4 * C * lt)                    # f32 temps (x, e, ...) + slack

    vmem_budget = 24 * one_mib                       # safe on every gen (v7x: 64 MiB)

    # ---- token tile: lane-dense (multiple of 128), as wide as reasonable ----
    if l_tile is None:
        l_tile = l_pad128 if l_pad128 <= 2048 else 1024
    l_tile = _cdiv(int(l_tile), 128) * 128
    l_tile = max(128, min(l_tile, l_pad128))
    n_l = _cdiv(L, l_tile)

    # ---- batch block: fatten steps to >= ~2 MiB of HBM traffic each ----------
    if b_blk is None:
        b_blk = 1
        while (b_blk < B
               and b_blk * (C + E) * l_tile * dtype_bytes < 2 * one_mib
               and vmem_bytes(2 * b_blk, l_tile) <= vmem_budget):
            b_blk *= 2
        b_blk = min(b_blk, B)
        # 2-TC chips (v7x / megacore): keep >= num_tc steps on a "parallel" axis
        # so both cores get work; single-TC v5e/v6e take the fewest, fattest steps.
        if num_tc > 1 and _cdiv(B, b_blk) * n_l < num_tc:
            if B >= num_tc:
                b_blk = max(1, _cdiv(B, num_tc))
            elif l_pad128 // 128 >= num_tc:
                l_tile = max(128, _cdiv(l_pad128 // num_tc, 128) * 128)
                n_l = _cdiv(L, l_tile)
    b_blk = max(1, min(int(b_blk), B))
    n_b = _cdiv(B, b_blk)

    # VMEM limit sized to actual usage (+~50% headroom), never over-reserving.
    vmem_limit = int(min(max(vmem_bytes(b_blk, l_tile) * 3 // 2, 16 * one_mib),
                         48 * one_mib))

    return pl.pallas_call(
        bridge_kernel,
        out_shape=jax.ShapeDtypeStruct((B, E, L), enc.dtype),
        grid_spec=pltpu.PrefetchScalarGridSpec(
            num_scalar_prefetch=0,
            grid=(n_b, n_l),
            in_specs=[
                # (b_blk, C, Lt): batch block, full channel dim, wide token tile.
                pl.BlockSpec((b_blk, C, l_tile), lambda b, l: (b, 0, l)),
                # Weight is tiny (E x C); constant index_map keeps it resident.
                pl.BlockSpec((E, C), lambda b, l: (0, 0)),
            ],
            # Keep output (E, Lt) with Lt lane-dense: unmasked vst path.
            out_specs=pl.BlockSpec((b_blk, E, l_tile), lambda b, l: (b, 0, l)),
        ),
        compiler_params=pltpu.CompilerParams(
            dimension_semantics=("parallel", "parallel"),
            vmem_limit_bytes=vmem_limit),
    )(enc, w)


def bridge_reference(enc, w):
    """Pure-JAX reference with the exact PyTorch bridge semantics."""
    sm = jax.nn.softmax(enc.astype(jnp.float32), axis=1)   # softmax over channels
    y = jnp.einsum("ec,bcl->bel", w.astype(jnp.float32), sm)
    return y.astype(enc.dtype)


if __name__ == "__main__":
    # Small synthetic shapes consistent with the module's bridge:
    #   enc output: (batch, middle_dim, tokens) ; match_channels: middle_dim -> embed_dim
    B = 2            # batch
    C = 32           # middle_dim (self.enc.out_channels)
    E = 16           # embed_dim

    key = jax.random.PRNGKey(0)
    k_enc1, k_enc2, k_w = jax.random.split(key, 3)
    w = 0.02 * jax.random.normal(k_w, (E, C), dtype=jnp.float32)

    # Case 1: realistic token count (middle_resolution**2 = 14**2 = 196),
    #         NOT a multiple of 128 -> padded tail lanes; single fat step.
    L1 = 196
    enc1 = jax.random.normal(k_enc1, (B, C, L1), dtype=jnp.float32)
    out1 = jax.block_until_ready(w_swintransformer_bridge(enc1, w))
    ref1 = bridge_reference(enc1, w)
    assert out1.shape == (B, E, L1)
    assert jnp.allclose(out1, ref1, atol=1e-4, rtol=1e-3), "mismatch vs reference (L=196)"

    # Case 2: larger token count, default heuristics (few fat steps).
    L2 = 2048
    enc2 = jax.random.normal(k_enc2, (B, C, L2), dtype=jnp.float32)
    out2 = jax.block_until_ready(w_swintransformer_bridge(enc2, w))
    ref2 = bridge_reference(enc2, w)
    assert out2.shape == (B, E, L2)
    assert jnp.allclose(out2, ref2, atol=1e-4, rtol=1e-3), "mismatch vs reference (L=2048)"

    # Case 3: explicit tiling to exercise a multi-tile (2, 4) grid / edge handling.
    out3 = jax.block_until_ready(
        w_swintransformer_bridge(enc2, w, l_tile=512, b_blk=1))
    assert jnp.allclose(out3, ref2, atol=1e-4, rtol=1e-3), "mismatch vs reference (tiled)"

    # Case 4: bf16 HBM path (f32 softmax inside the kernel; bf16 read/write streams).
    enc1_bf = enc1.astype(jnp.bfloat16)
    out4 = jax.block_until_ready(w_swintransformer_bridge(enc1_bf, w))
    ref4 = bridge_reference(enc1_bf, w)
    assert out4.dtype == jnp.bfloat16
    assert jnp.allclose(out4.astype(jnp.float32), ref4.astype(jnp.float32),
                        atol=5e-3, rtol=5e-2), "mismatch vs reference (bf16)"

    print("KERNEL_OK")
</pallas_src>

<mosaic_0001>
module attributes {stable_mosaic.version = 11 : i64} {
  func.func @bridge_kernel(%arg0: i32, %arg1: i32, %arg2: memref<2x32x256xf32, #tpu.memory_space<vmem>>, %arg3: memref<16x32xf32, #tpu.memory_space<vmem>>, %arg4: memref<2x16x256xf32, #tpu.memory_space<vmem>>) attributes {dimension_semantics = [#tpu.dimension_semantics<parallel>, #tpu.dimension_semantics<parallel>], iteration_bounds = array<i64: 1, 1>, scalar_prefetch = 0 : i64, scratch_operands = 0 : i64, tpu.core_type = #tpu.core_type<tc>, window_params = [{transform_indices = @transform_0, window_bounds = array<i64: 2, 32, 256>}, {pipeline_mode = #tpu.pipeline_mode<synchronous>, transform_indices = @transform_1, window_bounds = array<i64: 16, 32>}, {transform_indices = @transform_2, window_bounds = array<i64: 2, 16, 256>}]} {
    %c0 = arith.constant 0 : index
    %c0_0 = arith.constant 0 : index
    %0 = vector.load %arg3[%c0, %c0_0] : memref<16x32xf32, #tpu.memory_space<vmem>>, vector<16x32xf32>
    %c0_i32 = arith.constant 0 : i32
    %c2_i32 = arith.constant 2 : i32
    %1 = arith.addi %c0_i32, %c2_i32 : i32
    %c1_i32 = arith.constant 1 : i32
    scf.for %arg5 = %c0_i32 to %1 step %c1_i32  : i32 {
      %c1_i32_2 = arith.constant 1 : i32
      %2 = arith.muli %arg5, %c1_i32_2 : i32
      %c0_i32_3 = arith.constant 0 : i32
      %3 = arith.addi %c0_i32_3, %2 : i32
      %4 = arith.index_cast %3 : i32 to index
      %c0_4 = arith.constant 0 : index
      %c0_5 = arith.constant 0 : index
      %5 = vector.load %arg2[%4, %c0_4, %c0_5] : memref<2x32x256xf32, #tpu.memory_space<vmem>>, vector<1x32x256xf32>
      %6 = vector.shape_cast %5 : vector<1x32x256xf32> to vector<32x256xf32>
      %cst = arith.constant dense<0xFF800000> : vector<256xf32>
      %7 = vector.multi_reduction <maximumf>, %6, %cst [0] : vector<32x256xf32> to vector<256xf32>
      %8 = vector.shape_cast %7 : vector<256xf32> to vector<1x256xf32>
      %9 = vector.broadcast %8 : vector<1x256xf32> to vector<32x256xf32>
      %10 = arith.subf %6, %9 : vector<32x256xf32>
      %11 = math.exp %10 : vector<32x256xf32>
      %cst_6 = arith.constant dense<0.000000e+00> : vector<256xf32>
      %12 = vector.multi_reduction <add>, %11, %cst_6 [0] : vector<32x256xf32> to vector<256xf32>
      %13 = vector.shape_cast %12 : vector<256xf32> to vector<1x256xf32>
      %cst_7 = arith.constant dense<0.000000e+00> : vector<16x256xf32>
      %14 = tpu.matmul %0, %11, %cst_7 {dimension_numbers = #tpu.dot_dimension_numbers<[1], [0], [0], [1], [0, 0, 1, 1], [], []>} : vector<16x32xf32>, vector<32x256xf32>, vector<16x256xf32> -> vector<16x256xf32>
      %15 = tpu.reciprocal %13 : vector<1x256xf32> -> vector<1x256xf32>
      %16 = vector.broadcast %15 : vector<1x256xf32> to vector<16x256xf32>
      %17 = arith.mulf %14, %16 : vector<16x256xf32>
      %18 = arith.index_cast %3 : i32 to index
      %c0_8 = arith.constant 0 : index
      %c0_9 = arith.constant 0 : index
      %19 = vector.load %arg4[%18, %c0_8, %c0_9] : memref<2x16x256xf32, #tpu.memory_space<vmem>>, vector<1x16x256xf32>
      %20 = vector.shape_cast %19 : vector<1x16x256xf32> to vector<16x256xf32>
      %21 = vector.shape_cast %17 : vector<16x256xf32> to vector<1x16x256xf32>
      tpu.vector_store %arg4[%18, %c0_8, %c0_9], %21 {strides = array<i32>} : memref<2x16x256xf32, #tpu.memory_space<vmem>>, vector<1x16x256xf32>,
    }
    %c2_i32_1 = arith.constant 2 : i32
    return
  }
  func.func @transform_0(%arg0: i32, %arg1: i32) -> (i32, i32, i32) {
    %c0_i32 = arith.constant 0 : i32
    %c0_i32_0 = arith.constant 0 : i32
    return %arg0, %c0_i32, %arg1 : i32, i32, i32
  }
  func.func @transform_1(%arg0: i32, %arg1: i32) -> (i32, i32) {
    %c0_i32 = arith.constant 0 : i32
    %c0_i32_0 = arith.constant 0 : i32
    %c0_i32_1 = arith.constant 0 : i32
    return %c0_i32, %c0_i32_0 : i32, i32
  }
  func.func @transform_2(%arg0: i32, %arg1: i32) -> (i32, i32, i32) {
    %c0_i32 = arith.constant 0 : i32
    %c0_i32_0 = arith.constant 0 : i32
    return %arg0, %c0_i32, %arg1 : i32, i32, i32
  }
}

</mosaic_0001>

<llo_original>
// kernel: tpu_custom_call.1
$region0: #{tpu_custom_call.1}
  #allocation0 [shape = 'u32[]', space=smem, size = 0x4, offset = 0x4, fixed_abs, tag = 'smem constant byte address 0x4 - core index']
  #allocation1 [shape = 'u32[144,128]{1,0:T(1,128)}', space=vmem, size = 0x12000, scoped, tag = 'internal scratch']
  %s0 = inlined_call_operand.hbm [shape: f32[2,32,196], index: 0, kind: input, shape index: {}]
  %s1 = inlined_call_operand.hbm [shape: f32[16,32], index: 1, kind: input, shape index: {}]
  %s2 = inlined_call_operand.hbm [shape: f32[2,16,196], index: 2, kind: output, shape index: {}]
  %s3 = sld [smem:[#allocation0]]
  $region33: #{tpu_custom_call.1} parent=0
    _
  %s5 = ssub.s32 1, %s3
  %s6 = scalar_select 0, %s5, %s3
  $region1: #{tpu_custom_call.1} parent=0
    #allocation2 [shape = 'u8[65536]{0}', space=vmem, size = 0x10000, scoped, tag = 'input window, operand 0, single buffered']
    #allocation3 [shape = 's32[1]{0}', space=sflag, size = 0x4, scoped, tag = 'scoped memory for tpu_custom_call.1']
    #allocation4 [shape = 's32[1]{0}', space=sflag, size = 0x4, scoped, tag = 'scoped memory for tpu_custom_call.1']
    #allocation5 [shape = 'u8[8192]{0}', space=vmem, size = 0x2000, scoped, tag = 'input window, operand 1, single buffered']
    #allocation6 [shape = 's32[1]{0}', space=sflag, size = 0x4, scoped, tag = 'scoped memory for tpu_custom_call.1']
    #allocation7 [shape = 'u8[32768]{0}', space=vmem, size = 0x8000, scoped, tag = 'output window, operand 0, single buffered']
    %7 = vsyncpa [#allocation3], 0
    %8 = vsyncpa [#allocation6], 0
    %9 = vsyncpa [#allocation4], 0
    // Predicated region
    $region2: #{tpu_custom_call.1} parent=1 // pred_check
      _
    $region3: #{tpu_custom_call.1} parent=1 // pred_check_branch
      %11 = sbr.rel (0) target = $region5
    $region4: #{tpu_custom_call.1} parent=1 // pred_region
      %s13 = ssub.s32 2048, 2048
      %14 = vsyncadd [#allocation3], %s13
      %s15 = sshll.u32 [#allocation2], 4
      %s16 = int_to_ptr.vmem [resolvable:$true] %s15
      %21 = dma.hbm_to_vmem [thread:$0]  %s0, 2048, %s16, [#allocation3], 256, 256, 16
    $region5: #{tpu_custom_call.1} parent=1 // pred_fallthru
      _
    // Predicated region
    $region6: #{tpu_custom_call.1} parent=1 // pred_check
      _
    $region7: #{tpu_custom_call.1} parent=1 // pred_check_branch
      %23 = sbr.rel (0) target = $region9
    $region8: #{tpu_custom_call.1} parent=1 // pred_region
      %s25 = ssub.s32 256, 256
      %26 = vsyncadd [#allocation6], %s25
      %s27 = sshll.u32 [#allocation5], 4
      %s28 = int_to_ptr.vmem [resolvable:$true] %s27
      %33 = dma.hbm_to_vmem [thread:$0]  %s1, 256, %s28, [#allocation6], 128, 128, 8
    $region9: #{tpu_custom_call.1} parent=1 // pred_fallthru
      _
    // Predicated region
    $region10: #{tpu_custom_call.1} parent=1 // pred_check
      _
    $region11: #{tpu_custom_call.1} parent=1 // pred_check_branch
      %35 = sbr.rel (0) target = $region13
    $region12: #{tpu_custom_call.1} parent=1 // pred_region
      %36 = dma.done [#allocation3], 2048
    $region13: #{tpu_custom_call.1} parent=1 // pred_fallthru
      _
    // Predicated region
    $region14: #{tpu_custom_call.1} parent=1 // pred_check
      _
    $region15: #{tpu_custom_call.1} parent=1 // pred_check_branch
      %38 = sbr.rel (0) target = $region17
    $region16: #{tpu_custom_call.1} parent=1 // pred_region
      %39 = dma.done [#allocation6], 256
    $region17: #{tpu_custom_call.1} parent=1 // pred_fallthru
      _
    %v40 = vld [vmem:[#allocation5] sm:$0xff]
    %v41 = vld [vmem:[#allocation5 + $0x8] sm:$0xff]
    loop: start=0, step=1, limit=2
    $region18: #{tpu_custom_call.1} parent=1 // loop_pre_header
      _
    $region19: #{tpu_custom_call.1} parent=1 // loop_header
      %s43 = sphi 0, %s47
      %p44 = scmp.ge.s32.totalorder %s43, 2
    $region20: #{tpu_custom_call.1} parent=1 // loop_header_branch
      %46 = sbr.rel (%p44) target = $region24
    $region21: #{tpu_custom_call.1} parent=1 // loop_body
      %s48 = smul.u32 %s43, 8
      %s49 = smul.addr %s48, 8
      %s50 = scalar_lea.vmem [#allocation2], %s49
      %v51 = vld [vmem:[%s50] sm:$0xff]
      %v52 = vld [vmem:[%s50 + $0x8] sm:$0xff]
      %v53 = vld [vmem:[%s50 + $0x10] sm:$0xff]
      %v54 = vld [vmem:[%s50 + $0x18] sm:$0xff]
      %v55 = vld [vmem:[%s50 + $0x20] sm:$0xff]
      %v56 = vld [vmem:[%s50 + $0x28] sm:$0xff]
      %v57 = vld [vmem:[%s50 + $0x30] sm:$0xff]
      %v58 = vld [vmem:[%s50 + $0x38] sm:$0xff]
      %v59 = vmax.f32 %v51, %v55
      %v60 = vmax.f32 %v53, %v57
      %v61 = vmax.f32 %v59, %v60
      %v62 = vrot.slane %v61, 4
      %v63 = vmax.f32 %v61, %v62
      %v64 = vrot.slane %v63, 2
      %v65 = vmax.f32 %v63, %v64
      %v66 = vrot.slane %v65, 1
      %v67 = vmax.f32 %v65, %v66
      %v68 = vmax.f32 %v52, %v56
      %v69 = vmax.f32 %v54, %v58
      %v70 = vmax.f32 %v68, %v69
      %v71 = vrot.slane %v70, 4
      %v72 = vmax.f32 %v70, %v71
      %v73 = vrot.slane %v72, 2
      %v74 = vmax.f32 %v72, %v73
      %v75 = vrot.slane %v74, 1
      %v76 = vmax.f32 %v74, %v75
      %v77 = vsub.f32 %v51, %v67
      %v78 = vsub.f32 %v52, %v76
      %v79 = vsub.f32 %v53, %v67
      %v80 = vsub.f32 %v54, %v76
      %v81 = vsub.f32 %v55, %v67
      %v82 = vsub.f32 %v56, %v76
      %v83 = vsub.f32 %v57, %v67
      %v84 = vsub.f32 %v58, %v76
      %v85 = vmul.f32 %v77, 1.442695
      %v86 = vpow.pop %v85
      %v87 = vmul.f32 %v78, 1.442695
      %v88 = vpow.pop %v87
      %v89 = vmul.f32 %v79, 1.442695
      %v90 = vpow.pop %v89
      %v91 = vmul.f32 %v80, 1.442695
      %v92 = vpow.pop %v91
      %v93 = vmul.f32 %v81, 1.442695
      %v94 = vpow.pop %v93
      %v95 = vmul.f32 %v82, 1.442695
      %v96 = vpow.pop %v95
      %v97 = vmul.f32 %v83, 1.442695
      %v98 = vpow.pop %v97
      %v99 = vmul.f32 %v84, 1.442695
      %v100 = vpow.pop %v99
      %v101 = vadd.f32 %v86, %v90
      %v102 = vadd.f32 %v101, %v94
      %v103 = vadd.f32 %v102, %v98
      %v104 = vrot.slane %v103, 4
      %v105 = vadd.f32 %v103, %v104
      %v106 = vrot.slane %v105, 2
      %v107 = vadd.f32 %v105, %v106
      %v108 = vrot.slane %v107, 1
      %v109 = vadd.f32 %v107, %v108
      %v110 = vadd.f32 %v88, %v92
      %v111 = vadd.f32 %v110, %v96
      %v112 = vadd.f32 %v111, %v100
      %v113 = vrot.slane %v112, 4
      %v114 = vadd.f32 %v112, %v113
      %v115 = vrot.slane %v114, 2
      %v116 = vadd.f32 %v114, %v115
      %v117 = vrot.slane %v116, 1
      %v118 = vadd.f32 %v116, %v117
      %vm119 = vcmask 261120
      %v121 = vsel %vm119, %v40, 0
      %v124 = vsel %vm119, %v41, 0
      %126 = vmatprep.subr.mxu0 %v88
      %127 = vmatpush1.msra.mxu0 %v86
      %128 = vmatprep.subr.mxu0 %v92
      %129 = vmatpush1.msra.mxu0 %v90
      %130 = vmatprep.subr.mxu0 %v96
      %131 = vmatpush1.msra.mxu0 %v94
      %132 = vmatprep.subr.mxu0 %v100
      %133 = vmatpush1.msra.mxu0 %v98
      %134 = vmatprep.subr.mxu0 0.0
      %135 = vmatpush1.msra.mxu0 0.0
      %136 = vmatprep.subr.mxu0 0.0
      %137 = vmatpush1.msra.mxu0 0.0
      %138 = vmatprep.subr.mxu0 0.0
      %139 = vmatpush1.msra.mxu0 0.0
      %140 = vmatprep.subr.mxu0 0.0
      %141 = vmatpush1.msra.mxu0 0.0
      %142 = vmatprep.subr.mxu0 0.0
      %143 = vmatpush1.msra.mxu0 0.0
      %144 = vmatprep.subr.mxu0 0.0
      %145 = vmatpush1.msra.mxu0 0.0
      %146 = vmatprep.subr.mxu0 0.0
      %147 = vmatpush1.msra.mxu0 0.0
      %148 = vmatprep.subr.mxu0 0.0
      %149 = vmatpush1.msra.mxu0 0.0
      %150 = vmatprep.subr.mxu0 0.0
      %151 = vmatpush1.msra.mxu0 0.0
      %152 = vmatprep.subr.mxu0 0.0
      %153 = vmatpush1.msra.mxu0 0.0
      %154 = vmatprep.subr.mxu0 0.0
      %155 = vmatpush1.msra.mxu0 0.0
      %156 = vmatprep.subr.mxu0 0.0
      %157 = vmatpush1.msra.mxu0 0.0
      %158 = vmatprep.subr.mxu0 0.0
      %159 = vmatpush1.msra.mxu0 0.0
      %160 = vmatprep.subr.mxu0 0.0
      %161 = vmatpush1.msra.mxu0 0.0
      %162 = vmatprep.subr.mxu0 0.0
      %163 = vmatpush1.msra.mxu0 0.0
      %164 = vmatprep.subr.mxu0 0.0
      %165 = vmatpush1.msra.mxu0 0.0
      %166 = vmatprep.subr.mxu0 0.0
      %167 = vmatpush1.msra.mxu0 0.0
      %168 = vmatprep.subr.mxu0 0.0
      %169 = vmatpush1.msra.mxu0 0.0
      %170 = vmatprep.subr.mxu0 0.0
      %171 = vmatpush1.msra.mxu0 0.0
      %172 = vmatprep.subr.mxu0 0.0
      %173 = vmatpush1.msra.mxu0 0.0
      %174 = vmatprep.subr.mxu0 0.0
      %175 = vmatpush1.msra.mxu0 0.0
      %176 = vmatprep.subr.mxu0 0.0
      %177 = vmatpush1.msra.mxu0 0.0
      %178 = vmatprep.subr.mxu0 0.0
      %179 = vmatpush1.msra.mxu0 0.0
      %180 = vmatprep.subr.mxu0 0.0
      %181 = vmatpush1.msra.mxu0 0.0
      %182 = vmatprep.subr.mxu0 0.0
      %183 = vmatpush1.msra.mxu0 0.0
      %184 = vmatprep.subr.mxu0 0.0
      %185 = vmatpush1.msra.mxu0 0.0
      %186 = vmatprep.subr.mxu0 0.0
      %187 = vmatpush1.msra.mxu0 0.0
      %188 = vmatprep.subr.mxu0 0.0
      %189 = vmatpush1.msra.mxu0 0.0
      %190 = vmatprep.mubr.f32.mxu0 0.0
      %191 = vmatmul.mubr.f32.gmra.mrb[0].mxu0 %v121
      %v192 = vpop.f32.mrb[0].mxu0
      %v193 = vadd.f32 0.0, %v192
      %v194 = vpop.f32.mrb[0].mxu0
      %v195 = vadd.f32 0.0, %v194
      %196 = vmatprep.mubr.f32.mxu0 0.0
      %197 = vmatmul.mubr.f32.gmra.mrb[0].mxu0 %v124
      %v198 = vpop.f32.mrb[0].mxu0
      %v199 = vadd.f32 0.0, %v198
      %v200 = vpop.f32.mrb[0].mxu0
      %v201 = vadd.f32 0.0, %v200
      %202 = vdwg.mxu0
      %v203 = vrcp.pop %v109
      %v204 = vrcp.pop %v118
      %v205 = vmul.f32 %v193, %v203
      %v206 = vmul.f32 %v195, %v204
      %v207 = vmul.f32 %v199, %v203
      %v208 = vmul.f32 %v201, %v204
      %s209 = smul.u32 %s43, 4
      %s210 = smul.addr %s209, 8
      %s211 = scalar_lea.vmem [#allocation7], %s210
      %212 = vst [vmem:[%s211] sm:$0xff] %v205
      %213 = vst [vmem:[%s211 + $0x8] sm:$0xff] %v206
      %214 = vst [vmem:[%s211 + $0x10] sm:$0xff] %v207
      %215 = vst [vmem:[%s211 + $0x18] sm:$0xff] %v208
    $region22: #{tpu_custom_call.1} parent=1 // loop_footer
      %s47 = sadd.s32 1, %s43
    $region23: #{tpu_custom_call.1} parent=1 // loop_footer_branch
      %42 = sbr.rel target = $region19
    $region24: #{tpu_custom_call.1} parent=1 // loop_exit
      _
    // Predicated region
    $region25: #{tpu_custom_call.1} parent=1 // pred_check
      _
    $region26: #{tpu_custom_call.1} parent=1 // pred_check_branch
      %217 = sbr.rel (0) target = $region28
    $region27: #{tpu_custom_call.1} parent=1 // pred_region
      %s219 = ssub.s32 1024, 1024
      %220 = vsyncadd [#allocation4], %s219
      %s221 = sshll.u32 [#allocation7], 4
      %s222 = int_to_ptr.vmem [resolvable:$true] %s221
      %227 = dma.vmem_to_hbm [thread:$0]  %s222, 1024, %s2, [#allocation4], 256, 256, 16
    $region28: #{tpu_custom_call.1} parent=1 // pred_fallthru
      _
    // Predicated region
    $region29: #{tpu_custom_call.1} parent=1 // pred_check
      _
    $region30: #{tpu_custom_call.1} parent=1 // pred_check_branch
      %229 = sbr.rel (0) target = $region32
    $region31: #{tpu_custom_call.1} parent=1 // pred_region
      %230 = dma.done [#allocation4], 1024
    $region32: #{tpu_custom_call.1} parent=1 // pred_fallthru
      _
    %231 = vsyncpa [#allocation3], 1
    %232 = vsyncpa [#allocation6], 1
    %233 = vsyncpa [#allocation4], 1

</llo_original>
